<compile_context>
chip_gen: v7x
topology: tpu7x:2x2x1
jax: 0.10.0
libtpu: 0.0.40
codegen_flags: <defaults>
</compile_context>

<pallas_src>
import jax
import jax.numpy as jnp
from jax.experimental import pallas as pl
from jax.experimental.pallas import tpu as pltpu

_LANE = 128            # vreg lane width (fast axis / last dim)
_MAX_COLS = 32768      # lane-dense row width cap (multiple of 128)


# ---------------------------------------------------------------------------
# Kernel: base-class semantics = no transform → copy the lane-dense tile.
# A concrete subclass drops its real embedding math here.
# ---------------------------------------------------------------------------
def embed_skeleton_kernel(x_ref, o_ref):
    # TODO(synk): subclass embedding transform goes here.
    o_ref[...] = x_ref[...]


def _sublane(dtype) -> int:
    # dtype-aware packed sublane count: 8 (f32), 16 (bf16/f16), 32 (int8/fp8)
    return max(8, 32 // jnp.dtype(dtype).itemsize)


def _device_kind() -> str:
    try:
        return jax.devices()[0].device_kind.lower()
    except Exception:
        return ""


def _target_block_bytes(kind: str) -> int:
    # Per-generation per-step block budget (4 double-buffers must fit scoped VMEM).
    if "v7" in kind:
        return 8 << 20          # 4 x 8 MiB = 32 MiB buffers; 64 MiB physical is the wall
    if "v6" in kind:
        return 8 << 20          # 32 MiB buffers; 128 MiB physical
    return 2 << 20              # v5e / unknown: 8 MiB buffers < 16 MiB scoped default


def _vmem_limit_bytes(kind: str):
    if "v7" in kind:
        return 48 << 20         # headroom over 32 MiB default, well under 64 MiB physical
    if "v6" in kind:
        return 64 << 20         # plenty of headroom under 128 MiB physical
    return None                 # v5e / unknown: defaults are fine for 2 MiB blocks


def _lane_dense_cols(n: int) -> int:
    """Largest multiple of 128 that divides n, capped at _MAX_COLS (0 if none)."""
    if n % _LANE != 0:
        return 0
    c = min(n, _MAX_COLS)
    c -= c % _LANE
    while c >= _LANE and n % c != 0:
        c -= _LANE
    return c


def _identity_skeleton(x: jax.Array) -> jax.Array:
    """Pallas pipeline skeleton a subclass would inherit (identity copy)."""
    orig_shape = x.shape
    n = int(x.size)
    if n == 0:
        return x                                  # degenerate: nothing to move

    itemsize = jnp.dtype(x.dtype).itemsize
    sub = _sublane(x.dtype)
    kind = _device_kind()
    target_bytes = _target_block_bytes(kind)
    vmem_limit = _vmem_limit_bytes(kind)

    cols = _lane_dense_cols(n)
    if cols == 0:
        # n is not a multiple of 128: no lane-aligned factorization exists.
        if n * itemsize <= target_bytes:
            # Single block equal to the full array dims (exempt from the
            # (8,128) divisibility rule) — still zero wrapper-side copies.
            y = pl.pallas_call(
                embed_skeleton_kernel,
                out_shape=jax.ShapeDtypeStruct((1, n), x.dtype),
            )(x.reshape(1, n))
            return y.reshape(orig_shape)
        # TODO(synk): large lane-misaligned tensors would need a masked-tail
        # kernel; the abstract base has no transform, so identity is exact.
        return x

    rows = n // cols
    x2d = x.reshape(rows, cols)                   # pure reshape: no pad, no copy

    # dtype-aware sublane-aligned rows per ~target_bytes block
    target_rows = max(1, target_bytes // (cols * itemsize))
    if target_rows >= rows:
        block_rows = rows                         # single block (full dims)
    else:
        block_rows = max(sub, (target_rows // sub) * sub)

    grid = (pl.cdiv(rows, block_rows),)           # partial last block is masked by Pallas

    # v7x: split the independent row axis across both TensorCores.
    if "v7" in kind and grid[0] > 1:
        semantics = (getattr(pltpu, "CORE_PARALLEL", "parallel"),)
    else:
        semantics = ("parallel",)

    params = {"dimension_semantics": semantics}
    if vmem_limit is not None:
        params["vmem_limit_bytes"] = vmem_limit

    y2d = pl.pallas_call(
        embed_skeleton_kernel,
        out_shape=jax.ShapeDtypeStruct((rows, cols), x.dtype),
        grid=grid,
        in_specs=[pl.BlockSpec((block_rows, cols), lambda r: (r, 0))],
        out_specs=pl.BlockSpec((block_rows, cols), lambda r: (r, 0)),
        compiler_params=pltpu.CompilerParams(**params),
    )(x2d)

    return y2d.reshape(orig_shape)


class EmbedderBase:
    """JAX/Pallas mirror of the PyTorch EmbedderBase (abstract embedder)."""

    def __init__(self, dimension: int):
        self.d = dimension
        self.name = "base_embedder"

    def __call__(self, x: jax.Array, *, force_kernel: bool = False) -> jax.Array:
        # forward() is abstract in PyTorch — the only defined behavior is "no
        # transform". Short-circuit: returning x costs zero HBM traffic,
        # whereas an identity pallas_call re-reads + re-writes every byte.
        # The Pallas path (force_kernel=True) is the pipeline skeleton a
        # concrete subclass drops its embedding math into.
        if not force_kernel:
            return x
        return _identity_skeleton(x)


if __name__ == "__main__":
    key = jax.random.PRNGKey(0)
    # Small NCHW input consistent with an image-style embedder input.
    x = jax.random.normal(key, (2, 4, 16, 16), dtype=jnp.float32)

    embedder = EmbedderBase(dimension=32)

    # Base-class path: abstract forward -> identity short-circuit (zero traffic).
    y_fast = jax.block_until_ready(embedder(x))

    # Exercise the Pallas pipeline skeleton once so the kernel is compiled and
    # validated on the TPU.
    y_kernel = jax.block_until_ready(embedder(x, force_kernel=True))

    assert y_fast.shape == x.shape and y_fast.dtype == x.dtype
    assert y_kernel.shape == x.shape and y_kernel.dtype == x.dtype
    assert bool(jnp.allclose(y_fast, x))
    assert bool(jnp.allclose(y_kernel, x))
    print("KERNEL_OK")
</pallas_src>

<mosaic_0001>
module attributes {stable_mosaic.version = 11 : i64} {
  func.func @embed_skeleton_kernel(%arg0: i32, %arg1: memref<1x2048xf32, #tpu.memory_space<vmem>>, %arg2: memref<1x2048xf32, #tpu.memory_space<vmem>>) attributes {dimension_semantics = [#tpu.dimension_semantics<parallel>], iteration_bounds = array<i64: 1>, scalar_prefetch = 0 : i64, scratch_operands = 0 : i64, tpu.core_type = #tpu.core_type<tc>, window_params = [{transform_indices = @transform_0, window_bounds = array<i64: 1, 2048>}, {transform_indices = @transform_1, window_bounds = array<i64: 1, 2048>}]} {
    %c0 = arith.constant 0 : index
    %c0_0 = arith.constant 0 : index
    %0 = vector.load %arg1[%c0, %c0_0] : memref<1x2048xf32, #tpu.memory_space<vmem>>, vector<1x2048xf32>
    %c0_1 = arith.constant 0 : index
    %c0_2 = arith.constant 0 : index
    %1 = vector.load %arg2[%c0_1, %c0_2] : memref<1x2048xf32, #tpu.memory_space<vmem>>, vector<1x2048xf32>
    tpu.vector_store %arg2[%c0_1, %c0_2], %0 {strides = array<i32>} : memref<1x2048xf32, #tpu.memory_space<vmem>>, vector<1x2048xf32>,
    return
  }
  func.func @transform_0(%arg0: i32) -> (i32, i32) {
    %c0_i32 = arith.constant 0 : i32
    %c0_i32_0 = arith.constant 0 : i32
    return %arg0, %c0_i32 : i32, i32
  }
  func.func @transform_1(%arg0: i32) -> (i32, i32) {
    %c0_i32 = arith.constant 0 : i32
    %c0_i32_0 = arith.constant 0 : i32
    return %arg0, %c0_i32 : i32, i32
  }
}

</mosaic_0001>

<llo_original>
// kernel: tpu_custom_call.1
$region0: #{tpu_custom_call.1}
  #allocation0 [shape = 'u32[]', space=smem, size = 0x4, offset = 0x4, fixed_abs, tag = 'smem constant byte address 0x4 - core index']
  #allocation1 [shape = 'u32[144,128]{1,0:T(1,128)}', space=vmem, size = 0x12000, scoped, tag = 'internal scratch']
  %s0 = inlined_call_operand.hbm [shape: f32[1,2048], index: 0, kind: input, shape index: {}]
  %s1 = inlined_call_operand.hbm [shape: f32[1,2048], index: 1, kind: output, shape index: {}]
  %s2 = sld [smem:[#allocation0]]
  $region18: #{tpu_custom_call.1} parent=0
    _
  %s4 = ssub.s32 1, %s2
  %s5 = scalar_select 0, %s4, %s2
  $region1: #{tpu_custom_call.1} parent=0
    #allocation2 [shape = 'u8[8192]{0}', space=vmem, size = 0x2000, scoped, tag = 'input window, operand 0, single buffered']
    #allocation3 [shape = 's32[1]{0}', space=sflag, size = 0x4, scoped, tag = 'scoped memory for tpu_custom_call.1']
    #allocation4 [shape = 's32[1]{0}', space=sflag, size = 0x4, scoped, tag = 'scoped memory for tpu_custom_call.1']
    #allocation5 [shape = 'u8[8192]{0}', space=vmem, size = 0x2000, scoped, tag = 'output window, operand 0, single buffered']
    %6 = vsyncpa [#allocation3], 0
    %7 = vsyncpa [#allocation4], 0
    // Predicated region
    $region2: #{tpu_custom_call.1} parent=1 // pred_check
      _
    $region3: #{tpu_custom_call.1} parent=1 // pred_check_branch
      %9 = sbr.rel (0) target = $region5
    $region4: #{tpu_custom_call.1} parent=1 // pred_region
      %s11 = ssub.s32 256, 256
      %12 = vsyncadd [#allocation3], %s11
      %s14 = sshll.u32 [#allocation2], 4
      %s15 = int_to_ptr.vmem [resolvable:$true] %s14
      %17 = dma.hbm_to_vmem [thread:$0]  %s0, 256, %s15, [#allocation3]
    $region5: #{tpu_custom_call.1} parent=1 // pred_fallthru
      _
    // Predicated region
    $region6: #{tpu_custom_call.1} parent=1 // pred_check
      _
    $region7: #{tpu_custom_call.1} parent=1 // pred_check_branch
      %19 = sbr.rel (0) target = $region9
    $region8: #{tpu_custom_call.1} parent=1 // pred_region
      %20 = dma.done [#allocation3], 256
    $region9: #{tpu_custom_call.1} parent=1 // pred_fallthru
      _
    %v21 = vld [vmem:[#allocation2] sm:$0xff]
    %v22 = vld [vmem:[#allocation2 + $0x8] sm:$0xff]
    %23 = vst [vmem:[#allocation5] sm:$0xff] %v21
    %24 = vst [vmem:[#allocation5 + $0x8] sm:$0xff] %v22
    // Predicated region
    $region10: #{tpu_custom_call.1} parent=1 // pred_check
      _
    $region11: #{tpu_custom_call.1} parent=1 // pred_check_branch
      %26 = sbr.rel (0) target = $region13
    $region12: #{tpu_custom_call.1} parent=1 // pred_region
      %s28 = ssub.s32 256, 256
      %29 = vsyncadd [#allocation4], %s28
      %s31 = sshll.u32 [#allocation5], 4
      %s32 = int_to_ptr.vmem [resolvable:$true] %s31
      %34 = dma.vmem_to_hbm [thread:$0]  %s32, 256, %s1, [#allocation4]
    $region13: #{tpu_custom_call.1} parent=1 // pred_fallthru
      _
    // Predicated region
    $region14: #{tpu_custom_call.1} parent=1 // pred_check
      _
    $region15: #{tpu_custom_call.1} parent=1 // pred_check_branch
      %36 = sbr.rel (0) target = $region17
    $region16: #{tpu_custom_call.1} parent=1 // pred_region
      %37 = dma.done [#allocation4], 256
    $region17: #{tpu_custom_call.1} parent=1 // pred_fallthru
      _
    %38 = vsyncpa [#allocation3], 1
    %39 = vsyncpa [#allocation4], 1

</llo_original>
